<compile_context>
chip_gen: v6e
topology: v6e:2x2x1
jax: 0.10.0
libtpu: 0.0.40
codegen_flags: <defaults>
</compile_context>

<pallas_src>
import jax
import jax.numpy as jnp
from jax.experimental import pallas as pl
from jax.experimental.pallas import tpu as pltpu


def _matmul_kernel(x_ref, w_ref, o_ref):
    """One output block = (rows of x in this block) @ (full weight)."""
    o_ref[...] = jnp.dot(
        x_ref[...], w_ref[...], preferred_element_type=jnp.float32
    ).astype(o_ref.dtype)


# Whole-problem footprint below which a single kernel invocation is used.
_SINGLE_BLOCK_BYTES = 2 * 1024 * 1024
# Conservative double-buffered VMEM budget that is safe on every generation
# (v5e default scoped VMEM is 16 MiB; v7x physical VMEM is 64 MiB).
_VMEM_BUDGET_BYTES = 12 * 1024 * 1024


def _cost(M, K, N, itemsize):
    return pl.CostEstimate(
        flops=2 * M * K * N,
        transcendentals=0,
        bytes_accessed=(M * K + K * N + M * N) * itemsize,
    )


def projector_forward(x, proj, *, tm=None, force_tiled=False, use_bf16=False):
    """Computes x @ proj with a Pallas TPU kernel.

    x:    [M, K]
    proj: [K, N]
    out:  [M, N]  (same dtype as x)
    """
    M, K = x.shape
    K2, N = proj.shape
    assert K == K2, f"inner dims mismatch: {K} vs {K2}"

    out_dtype = x.dtype
    if use_bf16:
        # Halves HBM traffic on a bandwidth-bound kernel; accumulation stays
        # f32 inside the kernel via preferred_element_type.
        x = x.astype(jnp.bfloat16)
        proj = proj.astype(jnp.bfloat16)

    itemsize = jnp.dtype(x.dtype).itemsize
    total_bytes = (M * K + K * N + M * N) * itemsize
    ce = _cost(M, K, N, itemsize)

    # ---- Fast path: whole problem in one invocation (no grid, no scratch).
    if total_bytes <= _SINGLE_BLOCK_BYTES and not force_tiled:
        return pl.pallas_call(
            _matmul_kernel,
            out_shape=jax.ShapeDtypeStruct((M, N), out_dtype),
            in_specs=[
                pl.BlockSpec((M, K), lambda: (0, 0)),
                pl.BlockSpec((K, N), lambda: (0, 0)),
            ],
            out_specs=pl.BlockSpec((M, N), lambda: (0, 0)),
            cost_estimate=ce,
        )(x, proj)

    # ---- General path: tile M only; weight stays resident; K kept whole.
    if tm is None:
        # Mem-bound kernel: the bigger the row tile, the better (85%+ of HBM
        # roofline needs >=512-wide tiles). Keep >=2 blocks where possible so
        # the "parallel" axis can split across v7x's two TensorCores.
        if M >= 4096:
            tm = 2048
        elif M >= 2048:
            tm = 1024
        elif M >= 1024:
            tm = 512
        elif M >= 512:
            tm = 256
        else:
            tm = 128
    # Never let the block exceed the array (keeps the (8,128)/full-dim rule).
    if tm >= M:
        tm = M
    # VMEM safety: x tile + out tile are double-buffered, weight is resident.
    # Shrink tm if K/N ever generalize to something large.
    def _footprint(t):
        return (2 * t * (K + N) + K * N) * itemsize
    while tm > 128 and _footprint(tm) > _VMEM_BUDGET_BYTES:
        tm //= 2

    m_blocks = pl.cdiv(M, tm)

    # No padding of x and no out[:M] slice: the ragged last block reads past
    # the end of x (garbage rows) and its out-of-bounds rows are discarded on
    # writeback — valid because each output row depends only on its own x row.
    return pl.pallas_call(
        _matmul_kernel,
        out_shape=jax.ShapeDtypeStruct((M, N), out_dtype),
        grid_spec=pltpu.PrefetchScalarGridSpec(
            num_scalar_prefetch=0,
            grid=(m_blocks,),
            in_specs=[
                # Streamed x row-tiles: (tm, K), full K so no reduction axis.
                pl.BlockSpec((tm, K), lambda i: (i, 0)),
                # Resident weight: same (0, 0) block every step -> no per-step DMA.
                pl.BlockSpec((K, N), lambda i: (0, 0)),
            ],
            out_specs=pl.BlockSpec((tm, N), lambda i: (i, 0)),
        ),
        compiler_params=pltpu.CompilerParams(
            # Independent row-tiles: shardable across TensorCores (v7x megacore).
            dimension_semantics=("parallel",),
        ),
        cost_estimate=ce,
    )(x, proj)


if __name__ == "__main__":
    # Small shapes consistent with the module: input_dim=64, output_dim=128.
    input_dim, output_dim = 64, 128

    key = jax.random.PRNGKey(0)
    kx, kw, kx2 = jax.random.split(key, 3)

    # Parameter init mirrors torch.randn(input_dim, output_dim): standard normal.
    proj = jax.random.normal(kw, (input_dim, output_dim), dtype=jnp.float32)

    # --- Fast single-block path (the regime the module's shapes actually hit).
    M = 16
    x = jax.random.normal(kx, (M, input_dim), dtype=jnp.float32)
    ref = x @ proj
    out = projector_forward(x, proj)
    jax.block_until_ready(out)
    assert out.shape == (M, output_dim)
    assert jnp.allclose(out, ref, atol=1e-5, rtol=1e-5), "fast path mismatch"

    # --- M-tiled path with a ragged final block (no padding / no slicing):
    # M2 = 272 with tm=128 -> 3 blocks, last block covers rows 256..383 but
    # only rows 256..271 exist; its extra rows are discarded on writeback.
    M2 = 272
    x2 = jax.random.normal(kx2, (M2, input_dim), dtype=jnp.float32)
    ref2 = x2 @ proj
    out2 = projector_forward(x2, proj, force_tiled=True)
    jax.block_until_ready(out2)
    assert out2.shape == (M2, output_dim)
    assert jnp.allclose(out2, ref2, atol=1e-5, rtol=1e-5), "tiled path mismatch"

    print("KERNEL_OK")
</pallas_src>

<mosaic_0001>
module attributes {stable_mosaic.version = 11 : i64} {
  func.func @_matmul_kernel(%arg0: memref<16x64xf32, #tpu.memory_space<vmem>>, %arg1: memref<64x128xf32, #tpu.memory_space<vmem>>, %arg2: memref<16x128xf32, #tpu.memory_space<vmem>>) attributes {dimension_semantics = [], scalar_prefetch = 0 : i64, scratch_operands = 0 : i64, tpu.core_type = #tpu.core_type<tc>} {
    %c0 = arith.constant 0 : index
    %c0_0 = arith.constant 0 : index
    %0 = vector.load %arg0[%c0, %c0_0] : memref<16x64xf32, #tpu.memory_space<vmem>>, vector<16x64xf32>
    %c0_1 = arith.constant 0 : index
    %c0_2 = arith.constant 0 : index
    %1 = vector.load %arg1[%c0_1, %c0_2] : memref<64x128xf32, #tpu.memory_space<vmem>>, vector<64x128xf32>
    %cst = arith.constant dense<0.000000e+00> : vector<16x128xf32>
    %2 = tpu.matmul %0, %1, %cst {dimension_numbers = #tpu.dot_dimension_numbers<[1], [0], [0], [1], [0, 0, 1, 1], [], []>} : vector<16x64xf32>, vector<64x128xf32>, vector<16x128xf32> -> vector<16x128xf32>
    %c0_3 = arith.constant 0 : index
    %c0_4 = arith.constant 0 : index
    %3 = vector.load %arg2[%c0_3, %c0_4] : memref<16x128xf32, #tpu.memory_space<vmem>>, vector<16x128xf32>
    tpu.vector_store %arg2[%c0_3, %c0_4], %2 {strides = array<i32>} : memref<16x128xf32, #tpu.memory_space<vmem>>, vector<16x128xf32>,
    return
  }
}

</mosaic_0001>

<llo_original>
// kernel: tpu_custom_call.1
$region0: #{tpu_custom_call.1}
  #allocation0 [shape = 'u32[]', space=smem, size = 0x4, offset = 0x4, fixed_abs, tag = 'smem constant byte address 0x4 - core index']
  #allocation1 [shape = 'u32[144,128]{1,0:T(1,128)}', space=vmem, size = 0x12000, scoped, tag = 'internal scratch']
  %s0 = inlined_call_operand.hbm [shape: f32[16,64], index: 0, kind: input, shape index: {}]
  %s1 = inlined_call_operand.hbm [shape: f32[64,128], index: 1, kind: input, shape index: {}]
  %s2 = inlined_call_operand.hbm [shape: f32[16,128], index: 2, kind: output, shape index: {}]
  %s3 = sld [smem:[#allocation0]]
  $region26: #{tpu_custom_call.1} parent=0
    _
  %s5 = ssub.s32 1, %s3
  %s6 = scalar_select 0, %s5, %s3
  $region1: #{tpu_custom_call.1} parent=0
    #allocation2 [shape = 'u8[8192]{0}', space=vmem, size = 0x2000, scoped, tag = 'input window, operand 0, single buffered']
    #allocation3 [shape = 's32[1]{0}', space=sflag, size = 0x4, scoped, tag = 'scoped memory for tpu_custom_call.1']
    #allocation4 [shape = 's32[1]{0}', space=sflag, size = 0x4, scoped, tag = 'scoped memory for tpu_custom_call.1']
    #allocation5 [shape = 'u8[32768]{0}', space=vmem, size = 0x8000, scoped, tag = 'input window, operand 1, single buffered']
    #allocation6 [shape = 's32[1]{0}', space=sflag, size = 0x4, scoped, tag = 'scoped memory for tpu_custom_call.1']
    #allocation7 [shape = 'u8[8192]{0}', space=vmem, size = 0x2000, scoped, tag = 'output window, operand 0, single buffered']
    %7 = vsyncpa [#allocation3], 0
    %8 = vsyncpa [#allocation6], 0
    %9 = vsyncpa [#allocation4], 0
    // Predicated region
    $region2: #{tpu_custom_call.1} parent=1 // pred_check
      _
    $region3: #{tpu_custom_call.1} parent=1 // pred_check_branch
      %11 = sbr.rel (0) target = $region5
    $region4: #{tpu_custom_call.1} parent=1 // pred_region
      %s13 = ssub.s32 256, 256
      %14 = vsyncadd [#allocation3], %s13
      %s15 = sshll.u32 [#allocation2], 4
      %s16 = int_to_ptr.vmem [resolvable:$true] %s15
      %21 = dma.hbm_to_vmem [thread:$0]  %s0, 256, %s16, [#allocation3], 128, 128, 8
    $region5: #{tpu_custom_call.1} parent=1 // pred_fallthru
      _
    // Predicated region
    $region6: #{tpu_custom_call.1} parent=1 // pred_check
      _
    $region7: #{tpu_custom_call.1} parent=1 // pred_check_branch
      %23 = sbr.rel (0) target = $region9
    $region8: #{tpu_custom_call.1} parent=1 // pred_region
      %s25 = ssub.s32 1024, 1024
      %26 = vsyncadd [#allocation6], %s25
      %s27 = sshll.u32 [#allocation5], 4
      %s28 = int_to_ptr.vmem [resolvable:$true] %s27
      %33 = dma.hbm_to_vmem [thread:$0]  %s1, 1024, %s28, [#allocation6], 128, 128, 8
    $region9: #{tpu_custom_call.1} parent=1 // pred_fallthru
      _
    // Predicated region
    $region10: #{tpu_custom_call.1} parent=1 // pred_check
      _
    $region11: #{tpu_custom_call.1} parent=1 // pred_check_branch
      %35 = sbr.rel (0) target = $region13
    $region12: #{tpu_custom_call.1} parent=1 // pred_region
      %36 = dma.done [#allocation3], 256
    $region13: #{tpu_custom_call.1} parent=1 // pred_fallthru
      _
    // Predicated region
    $region14: #{tpu_custom_call.1} parent=1 // pred_check
      _
    $region15: #{tpu_custom_call.1} parent=1 // pred_check_branch
      %38 = sbr.rel (0) target = $region17
    $region16: #{tpu_custom_call.1} parent=1 // pred_region
      %39 = dma.done [#allocation6], 1024
    $region17: #{tpu_custom_call.1} parent=1 // pred_fallthru
      _
    %v40 = vld [vmem:[#allocation2] sm:$0xff]
    %v41 = vld [vmem:[#allocation2 + $0x8] sm:$0xff]
    %v42 = vld [vmem:[#allocation5] sm:$0xff]
    %v43 = vld [vmem:[#allocation5 + $0x8] sm:$0xff]
    %v44 = vld [vmem:[#allocation5 + $0x10] sm:$0xff]
    %v45 = vld [vmem:[#allocation5 + $0x18] sm:$0xff]
    %v46 = vld [vmem:[#allocation5 + $0x20] sm:$0xff]
    %v47 = vld [vmem:[#allocation5 + $0x28] sm:$0xff]
    %v48 = vld [vmem:[#allocation5 + $0x30] sm:$0xff]
    %v49 = vld [vmem:[#allocation5 + $0x38] sm:$0xff]
    %vm50 = vcmask 523264
    %v52 = vsel %vm50, %v40, 0
    %v55 = vsel %vm50, %v41, 0
    %57 = vmatprep.subr.mxu0 0.0
    %58 = vmatpush1.msra.mxu0 0.0
    %59 = vmatprep.subr.mxu0 0.0
    %60 = vmatpush1.msra.mxu0 0.0
    %61 = vmatprep.subr.mxu0 0.0
    %62 = vmatpush1.msra.mxu0 0.0
    %63 = vmatprep.subr.mxu0 0.0
    %64 = vmatpush1.msra.mxu0 0.0
    %65 = vmatprep.subr.mxu0 0.0
    %66 = vmatpush1.msra.mxu0 0.0
    %67 = vmatprep.subr.mxu0 0.0
    %68 = vmatpush1.msra.mxu0 0.0
    %69 = vmatprep.subr.mxu0 0.0
    %70 = vmatpush1.msra.mxu0 0.0
    %71 = vmatprep.subr.mxu0 0.0
    %72 = vmatpush1.msra.mxu0 0.0
    %73 = vmatprep.subr.mxu0 0.0
    %74 = vmatpush1.msra.mxu0 %v49
    %75 = vmatprep.subr.mxu0 0.0
    %76 = vmatpush1.msra.mxu0 %v48
    %77 = vmatprep.subr.mxu0 0.0
    %78 = vmatpush1.msra.mxu0 %v47
    %79 = vmatprep.subr.mxu0 0.0
    %80 = vmatpush1.msra.mxu0 %v46
    %81 = vmatprep.subr.mxu0 0.0
    %82 = vmatpush1.msra.mxu0 %v45
    %83 = vmatprep.subr.mxu0 0.0
    %84 = vmatpush1.msra.mxu0 %v44
    %85 = vmatprep.subr.mxu0 0.0
    %86 = vmatpush1.msra.mxu0 %v43
    %87 = vmatprep.subr.mxu0 0.0
    %88 = vmatpush1.msra.mxu0 %v42
    %89 = vmatprep.subr.mxu0 0.0
    %90 = vmatpush2.msra.mxu0 0.0
    %91 = vmatprep.subr.mxu0 0.0
    %92 = vmatpush2.msra.mxu0 0.0
    %93 = vmatprep.subr.mxu0 0.0
    %94 = vmatpush2.msra.mxu0 0.0
    %95 = vmatprep.subr.mxu0 0.0
    %96 = vmatpush2.msra.mxu0 0.0
    %97 = vmatprep.subr.mxu0 0.0
    %98 = vmatpush2.msra.mxu0 0.0
    %99 = vmatprep.subr.mxu0 0.0
    %100 = vmatpush2.msra.mxu0 0.0
    %101 = vmatprep.subr.mxu0 0.0
    %102 = vmatpush2.msra.mxu0 0.0
    %103 = vmatprep.subr.mxu0 0.0
    %104 = vmatpush2.msra.mxu0 0.0
    %105 = vmatprep.subr.mxu0 0.0
    %106 = vmatpush2.msra.mxu0 0.0
    %107 = vmatprep.subr.mxu0 0.0
    %108 = vmatpush2.msra.mxu0 0.0
    %109 = vmatprep.subr.mxu0 0.0
    %110 = vmatpush2.msra.mxu0 0.0
    %111 = vmatprep.subr.mxu0 0.0
    %112 = vmatpush2.msra.mxu0 0.0
    %113 = vmatprep.subr.mxu0 0.0
    %114 = vmatpush2.msra.mxu0 0.0
    %115 = vmatprep.subr.mxu0 0.0
    %116 = vmatpush2.msra.mxu0 0.0
    %117 = vmatprep.subr.mxu0 0.0
    %118 = vmatpush2.msra.mxu0 0.0
    %119 = vmatprep.subr.mxu0 0.0
    %120 = vmatpush2.msra.mxu0 0.0
    %121 = vmatprep.mubr.f32.mxu0 0.0
    %122 = vmatmul.mubr.f32.gmra.mxu0 %v52
    %v123 = vpop.f32.mrf.mxu0
    %v124 = vadd.f32 0.0, %v123
    %v125 = vpop.f32.mrf.mxu0
    %126 = vmatprep.mubr.f32.mxu0 0.0
    %127 = vmatmul.mubr.f32.gmra.mxu0 %v55
    %v128 = vpop.f32.mrf.mxu0
    %v129 = vadd.f32 0.0, %v128
    %v130 = vpop.f32.mrf.mxu0
    %131 = vdwg.mxu0
    %132 = vst [vmem:[#allocation7] sm:$0xff] %v124
    %133 = vst [vmem:[#allocation7 + $0x8] sm:$0xff] %v129
    // Predicated region
    $region18: #{tpu_custom_call.1} parent=1 // pred_check
      _
    $region19: #{tpu_custom_call.1} parent=1 // pred_check_branch
      %135 = sbr.rel (0) target = $region21
    $region20: #{tpu_custom_call.1} parent=1 // pred_region
      %s137 = ssub.s32 256, 256
      %138 = vsyncadd [#allocation4], %s137
      %s139 = sshll.u32 [#allocation7], 4
      %s140 = int_to_ptr.vmem [resolvable:$true] %s139
      %145 = dma.vmem_to_hbm [thread:$0]  %s140, 256, %s2, [#allocation4], 128, 128, 8
    $region21: #{tpu_custom_call.1} parent=1 // pred_fallthru
      _
    // Predicated region
    $region22: #{tpu_custom_call.1} parent=1 // pred_check
      _
    $region23: #{tpu_custom_call.1} parent=1 // pred_check_branch
      %147 = sbr.rel (0) target = $region25
    $region24: #{tpu_custom_call.1} parent=1 // pred_region
      %148 = dma.done [#allocation4], 256
    $region25: #{tpu_custom_call.1} parent=1 // pred_fallthru
      _
    %149 = vsyncpa [#allocation3], 1
    %150 = vsyncpa [#allocation6], 1
    %151 = vsyncpa [#allocation4], 1

</llo_original>
